<compile_context>
chip_gen: v6e
topology: v6e:2x2x1
jax: 0.10.0
libtpu: 0.0.40
codegen_flags: <defaults>
</compile_context>

<pallas_src>
import math
from functools import partial

import jax
import jax.numpy as jnp
from jax.experimental import pallas as pl
from jax.experimental.pallas import tpu as pltpu


def _round_up(a: int, b: int) -> int:
    return ((a + b - 1) // b) * b


def memory_gate_kernel(x_ref, wcat_ref, b1_ref, w2_ref, mv_ref, b2_ref, o_ref,
                       *, hidden):
    """One row-tile of MemoryGate.

    x_ref:    (TM, D)      input rows
    wcat_ref: (D, H + M)   [ w1 | memory_key.T * (1/sqrt(D)) ]  fused weight
    b1_ref:   (1, H)       first Linear bias
    w2_ref:   (1, H)       second Linear weight (as a row)
    mv_ref:   (1, M)       memory_value (as a row)
    b2_ref:   (1,) SMEM    second Linear bias (scalar)
    o_ref:    (1, TM)      lane-dense gate output
    """
    x = x_ref[...].astype(jnp.float32)

    # Single MXU pass over x covers both the gate projection and the memory
    # attention logits (softmax scale already folded into the packed weight).
    z = jnp.dot(x, wcat_ref[...], preferred_element_type=jnp.float32)  # (TM, H+M)

    # --- direct gate: Linear -> SiLU -> Linear(->1) ---
    h = z[:, :hidden] + b1_ref[...]
    h = h * jax.nn.sigmoid(h)                                  # SiLU (EUP)
    g = jnp.sum(h * w2_ref[...], axis=-1) + b2_ref[0]          # (TM,) VPU mul + lane reduce

    # --- memory gate: softmax over M keys, weighted by memory_value ---
    logits = z[:, hidden:]                                     # (TM, M)
    logits = logits - jnp.max(logits, axis=-1, keepdims=True)
    p = jnp.exp(logits)                                        # EUP
    num = jnp.sum(p * mv_ref[...], axis=-1)                    # (TM,)
    den = jnp.sum(p, axis=-1)                                  # (TM,)
    m = num * pl.reciprocal(den, approx=True)                  # EUP vrcp (free slot)

    gate = 0.5 * (jax.nn.sigmoid(g) + jax.nn.sigmoid(m))       # (TM,)
    o_ref[...] = gate[None, :].astype(o_ref.dtype)             # lane-dense store


def memory_gate_forward(x, params, *, tile_rows=512):
    """x: (batch, seq, dims) float32. Returns (batch, seq, 1)."""
    w1, b1, w2, b2 = params["w1"], params["b1"], params["w2"], params["b2"]
    mem_key, mem_val = params["memory_key"], params["memory_value"]

    B, S, D = x.shape
    M = mem_key.shape[0]
    H = w1.shape[1]
    N = B * S

    # ---- host-side weight packing (once per call; free vs streaming x) ----
    scale = 1.0 / math.sqrt(D)
    wcat = jnp.concatenate([w1, (mem_key * scale).T], axis=1)   # (D, H + M)
    b1r = b1.reshape(1, H)
    w2r = w2.reshape(1, H)
    mvr = mem_val.reshape(1, M)
    b2s = b2.reshape(1)

    # ---- row tiling: big tiles amortize ~600-cycle per-grid-step overhead;
    # tm is a multiple of 128 so the (1, tm) output block stays layout-legal.
    tm = _round_up(min(tile_rows, _round_up(N, 128)), 128)
    N_pad = _round_up(N, tm)
    x2 = x.reshape(N, D)
    if N_pad != N:
        x2 = jnp.pad(x2, ((0, N_pad - N), (0, 0)))   # zero rows are benign
    grid = (N_pad // tm,)

    # VMEM budget: double-buffered x & output tiles + (double-buffered) weights.
    def tile_bytes(r, c, itemsize=4):
        return _round_up(max(r, 1), 8) * _round_up(max(c, 1), 128) * itemsize

    vmem_need = (2 * tile_bytes(tm, D)
                 + 2 * tile_bytes(1, tm)
                 + 2 * (tile_bytes(D, H + M) + 2 * tile_bytes(1, H)
                        + tile_bytes(1, M)))
    vmem_limit = int(max(2 * vmem_need, 16 * 1024 * 1024))

    kernel = partial(memory_gate_kernel, hidden=H)

    out = pl.pallas_call(
        kernel,
        out_shape=jax.ShapeDtypeStruct((1, N_pad), x.dtype),
        grid_spec=pltpu.PrefetchScalarGridSpec(
            num_scalar_prefetch=0,
            grid=grid,
            in_specs=[
                pl.BlockSpec((tm, D), lambda i: (i, 0)),        # x row tile
                # TODO(synk): for very large D on v7x (64 MiB VMEM), mark the
                # constant-index weight specs pipeline_mode=pl.Buffered(1).
                pl.BlockSpec((D, H + M), lambda i: (0, 0)),     # fused weights
                pl.BlockSpec((1, H), lambda i: (0, 0)),         # b1
                pl.BlockSpec((1, H), lambda i: (0, 0)),         # w2 row
                pl.BlockSpec((1, M), lambda i: (0, 0)),         # memory_value row
                pl.BlockSpec(memory_space=pltpu.MemorySpace.SMEM),  # b2 scalar
            ],
            out_specs=pl.BlockSpec((1, tm), lambda i: (0, i)),  # lane-dense slab
        ),
        compiler_params=pltpu.CompilerParams(
            dimension_semantics=("parallel",),
            vmem_limit_bytes=vmem_limit),
    )(x2, wcat, b1r, w2r, mvr, b2s)

    return out[0, :N].reshape(B, S, 1)


def init_params(key, dims, memory_size=64):
    """Deterministic init matching the torch module's shapes/init schemes."""
    hidden = dims // 2
    k_mk, k_mv, k_w1, k_w2 = jax.random.split(key, 4)

    # nn.Parameter(torch.randn(...))
    memory_key = jax.random.normal(k_mk, (memory_size, dims), jnp.float32)
    memory_value = jax.random.normal(k_mv, (memory_size, 1), jnp.float32)

    # xavier_uniform for the two Linear layers, zero biases.
    # torch weight is (out, in); we store transposed (in, out) for x @ W.
    def xavier(k, fan_in, fan_out):
        limit = math.sqrt(6.0 / (fan_in + fan_out))
        return jax.random.uniform(k, (fan_in, fan_out), jnp.float32,
                                  minval=-limit, maxval=limit)

    w1 = xavier(k_w1, dims, hidden)          # (D, H)
    b1 = jnp.zeros((1, hidden), jnp.float32)
    w2 = xavier(k_w2, hidden, 1)             # (H, 1)
    b2 = jnp.zeros((1, 1), jnp.float32)

    return dict(w1=w1, b1=b1, w2=w2, b2=b2,
                memory_key=memory_key, memory_value=memory_value)


def memory_gate_reference(x, params):
    """Pure-JAX reference for correctness check."""
    D = x.shape[-1]
    h = x @ params["w1"] + params["b1"]
    h = h * jax.nn.sigmoid(h)
    direct = jax.nn.sigmoid(h @ params["w2"] + params["b2"])
    att = jax.nn.softmax((x @ params["memory_key"].T) / math.sqrt(D), axis=-1)
    mem = jax.nn.sigmoid(att @ params["memory_value"])
    return 0.5 * (direct + mem)


if __name__ == "__main__":
    batch, seq, dims, memory_size = 2, 8, 32, 64

    key = jax.random.PRNGKey(0)
    k_x, k_p = jax.random.split(key)
    x = jax.random.normal(k_x, (batch, seq, dims), jnp.float32)
    params = init_params(k_p, dims, memory_size)

    out = jax.block_until_ready(memory_gate_forward(x, params))
    ref = memory_gate_reference(x, params)

    assert out.shape == (batch, seq, 1)
    # approx reciprocal in the softmax denominator -> relax from 1e-5 to 1e-3
    assert jnp.allclose(out, ref, atol=1e-3, rtol=1e-3), "mismatch vs reference"

    print("KERNEL_OK")
</pallas_src>

<mosaic_0001>
module attributes {stable_mosaic.version = 11 : i64} {
  func.func @memory_gate_kernel(%arg0: i32, %arg1: memref<128x32xf32, #tpu.memory_space<vmem>>, %arg2: memref<32x80xf32, #tpu.memory_space<vmem>>, %arg3: memref<1x16xf32, #tpu.memory_space<vmem>>, %arg4: memref<1x16xf32, #tpu.memory_space<vmem>>, %arg5: memref<1x64xf32, #tpu.memory_space<vmem>>, %arg6: memref<1xf32, #tpu.memory_space<smem>>, %arg7: memref<1x128xf32, #tpu.memory_space<vmem>>) attributes {dimension_semantics = [#tpu.dimension_semantics<parallel>], iteration_bounds = array<i64: 1>, scalar_prefetch = 0 : i64, scratch_operands = 0 : i64, tpu.core_type = #tpu.core_type<tc>, window_params = [{transform_indices = @transform_0, window_bounds = array<i64: 128, 32>}, {pipeline_mode = #tpu.pipeline_mode<synchronous>, transform_indices = @transform_1, window_bounds = array<i64: 32, 80>}, {pipeline_mode = #tpu.pipeline_mode<synchronous>, transform_indices = @transform_2, window_bounds = array<i64: 1, 16>}, {pipeline_mode = #tpu.pipeline_mode<synchronous>, transform_indices = @transform_3, window_bounds = array<i64: 1, 16>}, {pipeline_mode = #tpu.pipeline_mode<synchronous>, transform_indices = @transform_4, window_bounds = array<i64: 1, 64>}, {transform_indices = @transform_5, window_bounds = array<i64: 1>}, {transform_indices = @transform_6, window_bounds = array<i64: 1, 128>}]} {
    %c0 = arith.constant 0 : index
    %c0_0 = arith.constant 0 : index
    %0 = vector.load %arg1[%c0, %c0_0] : memref<128x32xf32, #tpu.memory_space<vmem>>, vector<128x32xf32>
    %c0_1 = arith.constant 0 : index
    %c0_2 = arith.constant 0 : index
    %1 = vector.load %arg2[%c0_1, %c0_2] : memref<32x80xf32, #tpu.memory_space<vmem>>, vector<32x80xf32>
    %cst = arith.constant dense<0.000000e+00> : vector<128x80xf32>
    %2 = tpu.matmul %0, %1, %cst {dimension_numbers = #tpu.dot_dimension_numbers<[1], [0], [0], [1], [0, 0, 1, 1], [], []>} : vector<128x32xf32>, vector<32x80xf32>, vector<128x80xf32> -> vector<128x80xf32>
    %3 = vector.extract_strided_slice %2 {offsets = [0, 0], sizes = [128, 16], strides = [1, 1]} : vector<128x80xf32> to vector<128x16xf32>
    %c0_3 = arith.constant 0 : index
    %c0_4 = arith.constant 0 : index
    %4 = vector.load %arg3[%c0_3, %c0_4] : memref<1x16xf32, #tpu.memory_space<vmem>>, vector<1x16xf32>
    %5 = vector.broadcast %4 : vector<1x16xf32> to vector<128x16xf32>
    %6 = arith.addf %3, %5 : vector<128x16xf32>
    %7 = arith.negf %6 : vector<128x16xf32>
    %8 = math.exp %7 : vector<128x16xf32>
    %cst_5 = arith.constant 1.000000e+00 : f32
    %9 = vector.broadcast %cst_5 : f32 to vector<128x16xf32>
    %10 = arith.addf %9, %8 : vector<128x16xf32>
    %11 = arith.divf %9, %10 : vector<128x16xf32>
    %12 = arith.mulf %6, %11 : vector<128x16xf32>
    %c0_6 = arith.constant 0 : index
    %c0_7 = arith.constant 0 : index
    %13 = vector.load %arg4[%c0_6, %c0_7] : memref<1x16xf32, #tpu.memory_space<vmem>>, vector<1x16xf32>
    %14 = vector.broadcast %13 : vector<1x16xf32> to vector<128x16xf32>
    %15 = arith.mulf %12, %14 : vector<128x16xf32>
    %cst_8 = arith.constant dense<0.000000e+00> : vector<128xf32>
    %16 = vector.multi_reduction <add>, %15, %cst_8 [1] : vector<128x16xf32> to vector<128xf32>
    %c0_9 = arith.constant 0 : index
    %17 = memref.load %arg6[%c0_9] : memref<1xf32, #tpu.memory_space<smem>>
    %18 = vector.broadcast %17 : f32 to vector<128xf32>
    %19 = arith.addf %16, %18 : vector<128xf32>
    %20 = vector.extract_strided_slice %2 {offsets = [0, 16], sizes = [128, 64], strides = [1, 1]} : vector<128x80xf32> to vector<128x64xf32>
    %cst_10 = arith.constant dense<0xFF800000> : vector<128xf32>
    %21 = vector.multi_reduction <maximumf>, %20, %cst_10 [1] : vector<128x64xf32> to vector<128xf32>
    %22 = vector.shape_cast %21 : vector<128xf32> to vector<128x1xf32>
    %23 = vector.broadcast %22 : vector<128x1xf32> to vector<128x64xf32>
    %24 = arith.subf %20, %23 : vector<128x64xf32>
    %25 = math.exp %24 : vector<128x64xf32>
    %c0_11 = arith.constant 0 : index
    %c0_12 = arith.constant 0 : index
    %26 = vector.load %arg5[%c0_11, %c0_12] : memref<1x64xf32, #tpu.memory_space<vmem>>, vector<1x64xf32>
    %27 = vector.broadcast %26 : vector<1x64xf32> to vector<128x64xf32>
    %28 = arith.mulf %25, %27 : vector<128x64xf32>
    %cst_13 = arith.constant dense<0.000000e+00> : vector<128xf32>
    %29 = vector.multi_reduction <add>, %28, %cst_13 [1] : vector<128x64xf32> to vector<128xf32>
    %cst_14 = arith.constant dense<0.000000e+00> : vector<128xf32>
    %30 = vector.multi_reduction <add>, %25, %cst_14 [1] : vector<128x64xf32> to vector<128xf32>
    %31 = tpu.reciprocal %30 {approx = true} : vector<128xf32> -> vector<128xf32>
    %32 = arith.mulf %29, %31 : vector<128xf32>
    %33 = arith.negf %19 : vector<128xf32>
    %34 = math.exp %33 : vector<128xf32>
    %cst_15 = arith.constant 1.000000e+00 : f32
    %35 = vector.broadcast %cst_15 : f32 to vector<128xf32>
    %36 = arith.addf %35, %34 : vector<128xf32>
    %37 = arith.divf %35, %36 : vector<128xf32>
    %38 = arith.negf %32 : vector<128xf32>
    %39 = math.exp %38 : vector<128xf32>
    %cst_16 = arith.constant 1.000000e+00 : f32
    %40 = vector.broadcast %cst_16 : f32 to vector<128xf32>
    %41 = arith.addf %40, %39 : vector<128xf32>
    %42 = arith.divf %40, %41 : vector<128xf32>
    %43 = arith.addf %37, %42 : vector<128xf32>
    %cst_17 = arith.constant 5.000000e-01 : f32
    %44 = vector.broadcast %cst_17 : f32 to vector<128xf32>
    %45 = arith.mulf %44, %43 : vector<128xf32>
    %46 = vector.shape_cast %45 : vector<128xf32> to vector<1x128xf32>
    %c0_18 = arith.constant 0 : index
    %c0_19 = arith.constant 0 : index
    %47 = vector.load %arg7[%c0_18, %c0_19] : memref<1x128xf32, #tpu.memory_space<vmem>>, vector<1x128xf32>
    tpu.vector_store %arg7[%c0_18, %c0_19], %46 {strides = array<i32>} : memref<1x128xf32, #tpu.memory_space<vmem>>, vector<1x128xf32>,
    return
  }
  func.func @transform_0(%arg0: i32) -> (i32, i32) {
    %c0_i32 = arith.constant 0 : i32
    %c0_i32_0 = arith.constant 0 : i32
    return %arg0, %c0_i32 : i32, i32
  }
  func.func @transform_1(%arg0: i32) -> (i32, i32) {
    %c0_i32 = arith.constant 0 : i32
    %c0_i32_0 = arith.constant 0 : i32
    %c0_i32_1 = arith.constant 0 : i32
    return %c0_i32, %c0_i32_0 : i32, i32
  }
  func.func @transform_2(%arg0: i32) -> (i32, i32) {
    %c0_i32 = arith.constant 0 : i32
    %c0_i32_0 = arith.constant 0 : i32
    %c0_i32_1 = arith.constant 0 : i32
    return %c0_i32, %c0_i32_0 : i32, i32
  }
  func.func @transform_3(%arg0: i32) -> (i32, i32) {
    %c0_i32 = arith.constant 0 : i32
    %c0_i32_0 = arith.constant 0 : i32
    %c0_i32_1 = arith.constant 0 : i32
    return %c0_i32, %c0_i32_0 : i32, i32
  }
  func.func @transform_4(%arg0: i32) -> (i32, i32) {
    %c0_i32 = arith.constant 0 : i32
    %c0_i32_0 = arith.constant 0 : i32
    %c0_i32_1 = arith.constant 0 : i32
    return %c0_i32, %c0_i32_0 : i32, i32
  }
  func.func @transform_5(%arg0: i32) -> i32 {
    %c0_i32 = arith.constant 0 : i32
    %c0_i32_0 = arith.constant 0 : i32
    return %c0_i32 : i32
  }
  func.func @transform_6(%arg0: i32) -> (i32, i32) {
    %c0_i32 = arith.constant 0 : i32
    %c0_i32_0 = arith.constant 0 : i32
    return %c0_i32, %arg0 : i32, i32
  }
}

</mosaic_0001>

<llo_original>
// kernel: tpu_custom_call.1
$region0: #{tpu_custom_call.1}
  #allocation0 [shape = 'u32[]', space=smem, size = 0x4, offset = 0x4, fixed_abs, tag = 'smem constant byte address 0x4 - core index']
  #allocation1 [shape = 'u32[144,128]{1,0:T(1,128)}', space=vmem, size = 0x12000, scoped, tag = 'internal scratch']
  #allocation2 [shape = 'f32[1]{0:T(128)S(6)}', space=smem, size = 0x200, scoped, tag = 'scoped memory for tpu_custom_call.1']
  %s0 = inlined_call_operand.vmem [shape: f32[128,32], index: 0, kind: input, shape index: {}]
  %s1 = inlined_call_operand.vmem [shape: f32[32,80], index: 1, kind: input, shape index: {}]
  %s2 = inlined_call_operand.vmem [shape: f32[1,16], index: 2, kind: input, shape index: {}]
  %s3 = inlined_call_operand.vmem [shape: f32[1,16], index: 3, kind: input, shape index: {}]
  %s4 = inlined_call_operand.vmem [shape: f32[1,64], index: 4, kind: input, shape index: {}]
  %s5 = inlined_call_operand.<no memory space> [shape: f32[1], index: 5, kind: input, shape index: {}]
  %s6 = inlined_call_operand.hbm [shape: f32[1,128], index: 6, kind: output, shape index: {}]
  %s7 = sld [smem:[#allocation0]]
  $region34: #{tpu_custom_call.1} parent=0
    _
  %s9 = ssub.s32 1, %s7
  %s10 = scalar_select 0, %s9, %s7
  %11 = sst [smem:[#allocation2]] %s5
  $region1: #{tpu_custom_call.1} parent=0
    #allocation3 [shape = 'u8[512]{0}', space=vmem, size = 0x400, scoped, tag = 'output window, operand 0, single buffered']
    #allocation4 [shape = 's32[1]{0}', space=sflag, size = 0x4, scoped, tag = 'scoped memory for tpu_custom_call.1']
    %12 = vsyncpa [#allocation4], 0
    // Predicated region
    $region2: #{tpu_custom_call.1} parent=1 // pred_check
      _
    $region3: #{tpu_custom_call.1} parent=1 // pred_check_branch
      %14 = sbr.rel (0) target = $region5
    $region4: #{tpu_custom_call.1} parent=1 // pred_region
      _
    $region5: #{tpu_custom_call.1} parent=1 // pred_fallthru
      _
    // Predicated region
    $region6: #{tpu_custom_call.1} parent=1 // pred_check
      _
    $region7: #{tpu_custom_call.1} parent=1 // pred_check_branch
      %16 = sbr.rel (0) target = $region9
    $region8: #{tpu_custom_call.1} parent=1 // pred_region
      _
    $region9: #{tpu_custom_call.1} parent=1 // pred_fallthru
      _
    // Predicated region
    $region10: #{tpu_custom_call.1} parent=1 // pred_check
      _
    $region11: #{tpu_custom_call.1} parent=1 // pred_check_branch
      %18 = sbr.rel (0) target = $region13
    $region12: #{tpu_custom_call.1} parent=1 // pred_region
      _
    $region13: #{tpu_custom_call.1} parent=1 // pred_fallthru
      _
    // Predicated region
    $region14: #{tpu_custom_call.1} parent=1 // pred_check
      _
    $region15: #{tpu_custom_call.1} parent=1 // pred_check_branch
      %20 = sbr.rel (0) target = $region17
    $region16: #{tpu_custom_call.1} parent=1 // pred_region
      _
    $region17: #{tpu_custom_call.1} parent=1 // pred_fallthru
      _
    // Predicated region
    $region18: #{tpu_custom_call.1} parent=1 // pred_check
      _
    $region19: #{tpu_custom_call.1} parent=1 // pred_check_branch
      %22 = sbr.rel (0) target = $region21
    $region20: #{tpu_custom_call.1} parent=1 // pred_region
      _
    $region21: #{tpu_custom_call.1} parent=1 // pred_fallthru
      _
    // Predicated region
    $region22: #{tpu_custom_call.1} parent=1 // pred_check
      _
    $region23: #{tpu_custom_call.1} parent=1 // pred_check_branch
      %24 = sbr.rel (0) target = $region25
    $region24: #{tpu_custom_call.1} parent=1 // pred_region
      _
    $region25: #{tpu_custom_call.1} parent=1 // pred_fallthru
      _
    %v25 = vld [vmem:[%s0] sm:$0xff]
    %v26 = vld [vmem:[%s0 + $0x8] sm:$0xff]
    %v27 = vld [vmem:[%s0 + $0x10] sm:$0xff]
    %v28 = vld [vmem:[%s0 + $0x18] sm:$0xff]
    %v29 = vld [vmem:[%s0 + $0x20] sm:$0xff]
    %v30 = vld [vmem:[%s0 + $0x28] sm:$0xff]
    %v31 = vld [vmem:[%s0 + $0x30] sm:$0xff]
    %v32 = vld [vmem:[%s0 + $0x38] sm:$0xff]
    %v33 = vld [vmem:[%s0 + $0x40] sm:$0xff]
    %v34 = vld [vmem:[%s0 + $0x48] sm:$0xff]
    %v35 = vld [vmem:[%s0 + $0x50] sm:$0xff]
    %v36 = vld [vmem:[%s0 + $0x58] sm:$0xff]
    %v37 = vld [vmem:[%s0 + $0x60] sm:$0xff]
    %v38 = vld [vmem:[%s0 + $0x68] sm:$0xff]
    %v39 = vld [vmem:[%s0 + $0x70] sm:$0xff]
    %v40 = vld [vmem:[%s0 + $0x78] sm:$0xff]
    %v41 = vld [vmem:[%s1] sm:$0xff]
    %v42 = vld [vmem:[%s1 + $0x8] sm:$0xff]
    %v43 = vld [vmem:[%s1 + $0x10] sm:$0xff]
    %v44 = vld [vmem:[%s1 + $0x18] sm:$0xff]
    %vm45 = vcmask 261120
    %v47 = vsel %vm45, %v25, 0
    %v50 = vsel %vm45, %v26, 0
    %v53 = vsel %vm45, %v27, 0
    %v56 = vsel %vm45, %v28, 0
    %v59 = vsel %vm45, %v29, 0
    %v62 = vsel %vm45, %v30, 0
    %v65 = vsel %vm45, %v31, 0
    %v68 = vsel %vm45, %v32, 0
    %v71 = vsel %vm45, %v33, 0
    %v74 = vsel %vm45, %v34, 0
    %v77 = vsel %vm45, %v35, 0
    %v80 = vsel %vm45, %v36, 0
    %v83 = vsel %vm45, %v37, 0
    %v86 = vsel %vm45, %v38, 0
    %v89 = vsel %vm45, %v39, 0
    %v92 = vsel %vm45, %v40, 0
    %94 = vmatprep.subr.mxu0 0.0
    %95 = vmatpush1.msra.mxu0 0.0
    %96 = vmatprep.subr.mxu0 0.0
    %97 = vmatpush1.msra.mxu0 0.0
    %98 = vmatprep.subr.mxu0 0.0
    %99 = vmatpush1.msra.mxu0 0.0
    %100 = vmatprep.subr.mxu0 0.0
    %101 = vmatpush1.msra.mxu0 0.0
    %102 = vmatprep.subr.mxu0 0.0
    %103 = vmatpush1.msra.mxu0 0.0
    %104 = vmatprep.subr.mxu0 0.0
    %105 = vmatpush1.msra.mxu0 0.0
    %106 = vmatprep.subr.mxu0 0.0
    %107 = vmatpush1.msra.mxu0 0.0
    %108 = vmatprep.subr.mxu0 0.0
    %109 = vmatpush1.msra.mxu0 0.0
    %110 = vmatprep.subr.mxu0 0.0
    %111 = vmatpush1.msra.mxu0 0.0
    %112 = vmatprep.subr.mxu0 0.0
    %113 = vmatpush1.msra.mxu0 0.0
    %114 = vmatprep.subr.mxu0 0.0
    %115 = vmatpush1.msra.mxu0 0.0
    %116 = vmatprep.subr.mxu0 0.0
    %117 = vmatpush1.msra.mxu0 0.0
    %118 = vmatprep.subr.mxu0 0.0
    %119 = vmatpush1.msra.mxu0 %v44
    %120 = vmatprep.subr.mxu0 0.0
    %121 = vmatpush1.msra.mxu0 %v43
    %122 = vmatprep.subr.mxu0 0.0
    %123 = vmatpush1.msra.mxu0 %v42
    %124 = vmatprep.subr.mxu0 0.0
    %125 = vmatpush1.msra.mxu0 %v41
    %126 = vmatprep.subr.mxu0 0.0
    %127 = vmatpush2.msra.mxu0 0.0
    %128 = vmatprep.subr.mxu0 0.0
    %129 = vmatpush2.msra.mxu0 0.0
    %130 = vmatprep.subr.mxu0 0.0
    %131 = vmatpush2.msra.mxu0 0.0
    %132 = vmatprep.subr.mxu0 0.0
    %133 = vmatpush2.msra.mxu0 0.0
    %134 = vmatprep.subr.mxu0 0.0
    %135 = vmatpush2.msra.mxu0 0.0
    %136 = vmatprep.subr.mxu0 0.0
    %137 = vmatpush2.msra.mxu0 0.0
    %138 = vmatprep.subr.mxu0 0.0
    %139 = vmatpush2.msra.mxu0 0.0
    %140 = vmatprep.subr.mxu0 0.0
    %141 = vmatpush2.msra.mxu0 0.0
    %142 = vmatprep.subr.mxu0 0.0
    %143 = vmatpush2.msra.mxu0 0.0
    %144 = vmatprep.subr.mxu0 0.0
    %145 = vmatpush2.msra.mxu0 0.0
    %146 = vmatprep.subr.mxu0 0.0
    %147 = vmatpush2.msra.mxu0 0.0
    %148 = vmatprep.subr.mxu0 0.0
    %149 = vmatpush2.msra.mxu0 0.0
    %150 = vmatprep.subr.mxu0 0.0
    %151 = vmatpush2.msra.mxu0 0.0
    %152 = vmatprep.subr.mxu0 0.0
    %153 = vmatpush2.msra.mxu0 0.0
    %154 = vmatprep.subr.mxu0 0.0
    %155 = vmatpush2.msra.mxu0 0.0
    %156 = vmatprep.subr.mxu0 0.0
    %157 = vmatpush2.msra.mxu0 0.0
    %158 = vmatprep.mubr.f32.mxu0 0.0
    %159 = vmatmul.mubr.f32.gmra.mxu0 %v47
    %v160 = vpop.f32.mrf.mxu0
    %v161 = vadd.f32 0.0, %v160
    %v162 = vpop.f32.mrf.mxu0
    %163 = vmatprep.mubr.f32.mxu0 0.0
    %164 = vmatmul.mubr.f32.gmra.mxu0 %v50
    %v165 = vpop.f32.mrf.mxu0
    %v166 = vadd.f32 0.0, %v165
    %v167 = vpop.f32.mrf.mxu0
    %168 = vmatprep.mubr.f32.mxu0 0.0
    %169 = vmatmul.mubr.f32.gmra.mxu0 %v53
    %v170 = vpop.f32.mrf.mxu0
    %v171 = vadd.f32 0.0, %v170
    %v172 = vpop.f32.mrf.mxu0
    %173 = vmatprep.mubr.f32.mxu0 0.0
    %174 = vmatmul.mubr.f32.gmra.mxu0 %v56
    %v175 = vpop.f32.mrf.mxu0
    %v176 = vadd.f32 0.0, %v175
    %v177 = vpop.f32.mrf.mxu0
    %178 = vmatprep.mubr.f32.mxu0 0.0
    %179 = vmatmul.mubr.f32.gmra.mxu0 %v59
    %v180 = vpop.f32.mrf.mxu0
    %v181 = vadd.f32 0.0, %v180
    %v182 = vpop.f32.mrf.mxu0
    %183 = vmatprep.mubr.f32.mxu0 0.0
    %184 = vmatmul.mubr.f32.gmra.mxu0 %v62
    %v185 = vpop.f32.mrf.mxu0
    %v186 = vadd.f32 0.0, %v185
    %v187 = vpop.f32.mrf.mxu0
    %188 = vmatprep.mubr.f32.mxu0 0.0
    %189 = vmatmul.mubr.f32.gmra.mxu0 %v65
    %v190 = vpop.f32.mrf.mxu0
    %v191 = vadd.f32 0.0, %v190
    %v192 = vpop.f32.mrf.mxu0
    %193 = vmatprep.mubr.f32.mxu0 0.0
    %194 = vmatmul.mubr.f32.gmra.mxu0 %v68
    %v195 = vpop.f32.mrf.mxu0
    %v196 = vadd.f32 0.0, %v195
    %v197 = vpop.f32.mrf.mxu0
    %198 = vmatprep.mubr.f32.mxu0 0.0
    %199 = vmatmul.mubr.f32.gmra.mxu0 %v71
    %v200 = vpop.f32.mrf.mxu0
    %v201 = vadd.f32 0.0, %v200
    %v202 = vpop.f32.mrf.mxu0
    %203 = vmatprep.mubr.f32.mxu0 0.0
    %204 = vmatmul.mubr.f32.gmra.mxu0 %v74
    %v205 = vpop.f32.mrf.mxu0
    %v206 = vadd.f32 0.0, %v205
    %v207 = vpop.f32.mrf.mxu0
    %208 = vmatprep.mubr.f32.mxu0 0.0
    %209 = vmatmul.mubr.f32.gmra.mxu0 %v77
    %v210 = vpop.f32.mrf.mxu0
    %v211 = vadd.f32 0.0, %v210
    %v212 = vpop.f32.mrf.mxu0
    %213 = vmatprep.mubr.f32.mxu0 0.0
    %214 = vmatmul.mubr.f32.gmra.mxu0 %v80
    %v215 = vpop.f32.mrf.mxu0
    %v216 = vadd.f32 0.0, %v215
    %v217 = vpop.f32.mrf.mxu0
    %218 = vmatprep.mubr.f32.mxu0 0.0
    %219 = vmatmul.mubr.f32.gmra.mxu0 %v83
    %v220 = vpop.f32.mrf.mxu0
    %v221 = vadd.f32 0.0, %v220
    %v222 = vpop.f32.mrf.mxu0
    %223 = vmatprep.mubr.f32.mxu0 0.0
    %224 = vmatmul.mubr.f32.gmra.mxu0 %v86
    %v225 = vpop.f32.mrf.mxu0
    %v226 = vadd.f32 0.0, %v225
    %v227 = vpop.f32.mrf.mxu0
    %228 = vmatprep.mubr.f32.mxu0 0.0
    %229 = vmatmul.mubr.f32.gmra.mxu0 %v89
    %v230 = vpop.f32.mrf.mxu0
    %v231 = vadd.f32 0.0, %v230
    %v232 = vpop.f32.mrf.mxu0
    %233 = vmatprep.mubr.f32.mxu0 0.0
    %234 = vmatmul.mubr.f32.gmra.mxu0 %v92
    %v235 = vpop.f32.mrf.mxu0
    %v236 = vadd.f32 0.0, %v235
    %v237 = vpop.f32.mrf.mxu0
    %238 = vdwg.mxu0
    %v239 = vld [vmem:[%s2] sm:$0x1]
    %v241 = vlaneseq
    %v242 = vshrl.u32 %v241, 7
    %v243 = vsub.s32 0, %v242
    %v244 = vrot.slane %v239, %v243
    %v246 = vadd.f32 %v161, %v244
    %v247 = vadd.f32 %v166, %v244
    %v248 = vadd.f32 %v171, %v244
    %v249 = vadd.f32 %v176, %v244
    %v250 = vadd.f32 %v181, %v244
    %v251 = vadd.f32 %v186, %v244
    %v252 = vadd.f32 %v191, %v244
    %v253 = vadd.f32 %v196, %v244
    %v254 = vadd.f32 %v201, %v244
    %v255 = vadd.f32 %v206, %v244
    %v256 = vadd.f32 %v211, %v244
    %v257 = vadd.f32 %v216, %v244
    %v258 = vadd.f32 %v221, %v244
    %v259 = vadd.f32 %v226, %v244
    %v260 = vadd.f32 %v231, %v244
    %v261 = vadd.f32 %v236, %v244
    %v262 = vxor.u32 %v246, 2147483648
    %v263 = vxor.u32 %v247, 2147483648
    %v264 = vxor.u32 %v248, 2147483648
    %v265 = vxor.u32 %v249, 2147483648
    %v266 = vxor.u32 %v250, 2147483648
    %v267 = vxor.u32 %v251, 2147483648
    %v268 = vxor.u32 %v252, 2147483648
    %v269 = vxor.u32 %v253, 2147483648
    %v270 = vxor.u32 %v254, 2147483648
    %v271 = vxor.u32 %v255, 2147483648
    %v272 = vxor.u32 %v256, 2147483648
    %v273 = vxor.u32 %v257, 2147483648
    %v274 = vxor.u32 %v258, 2147483648
    %v275 = vxor.u32 %v259, 2147483648
    %v276 = vxor.u32 %v260, 2147483648
    %v277 = vxor.u32 %v261, 2147483648
    %v278 = vmul.f32 %v262, 1.442695
    %v279 = vpow.pop %v278
    %v280 = vmul.f32 %v263, 1.442695
    %v281 = vpow.pop %v280
    %v282 = vmul.f32 %v264, 1.442695
    %v283 = vpow.pop %v282
    %v284 = vmul.f32 %v265, 1.442695
    %v285 = vpow.pop %v284
    %v286 = vmul.f32 %v266, 1.442695
    %v287 = vpow.pop %v286
    %v288 = vmul.f32 %v267, 1.442695
    %v289 = vpow.pop %v288
    %v290 = vmul.f32 %v268, 1.442695
    %v291 = vpow.pop %v290
    %v292 = vmul.f32 %v269, 1.442695
    %v293 = vpow.pop %v292
    %v294 = vmul.f32 %v270, 1.442695
    %v295 = vpow.pop %v294
    %v296 = vmul.f32 %v271, 1.442695
    %v297 = vpow.pop %v296
    %v298 = vmul.f32 %v272, 1.442695
    %v299 = vpow.pop %v298
    %v300 = vmul.f32 %v273, 1.442695
    %v301 = vpow.pop %v300
    %v302 = vmul.f32 %v274, 1.442695
    %v303 = vpow.pop %v302
    %v304 = vmul.f32 %v275, 1.442695
    %v305 = vpow.pop %v304
    %v306 = vmul.f32 %v276, 1.442695
    %v307 = vpow.pop %v306
    %v308 = vmul.f32 %v277, 1.442695
    %v309 = vpow.pop %v308
    %v310 = vadd.f32 %v279, 1.0
    %v311 = vadd.f32 %v281, 1.0
    %v312 = vadd.f32 %v283, 1.0
    %v313 = vadd.f32 %v285, 1.0
    %v314 = vadd.f32 %v287, 1.0
    %v315 = vadd.f32 %v289, 1.0
    %v316 = vadd.f32 %v291, 1.0
    %v317 = vadd.f32 %v293, 1.0
    %v318 = vadd.f32 %v295, 1.0
    %v319 = vadd.f32 %v297, 1.0
    %v320 = vadd.f32 %v299, 1.0
    %v321 = vadd.f32 %v301, 1.0
    %v322 = vadd.f32 %v303, 1.0
    %v323 = vadd.f32 %v305, 1.0
    %v324 = vadd.f32 %v307, 1.0
    %v325 = vadd.f32 %v309, 1.0
    %v326 = vrcp.pop %v310
    %v327 = vmul.f32 1.0, %v326
    %v328 = vrcp.pop %v311
    %v329 = vmul.f32 1.0, %v328
    %v330 = vrcp.pop %v312
    %v331 = vmul.f32 1.0, %v330
    %v332 = vrcp.pop %v313
    %v333 = vmul.f32 1.0, %v332
    %v334 = vrcp.pop %v314
    %v335 = vmul.f32 1.0, %v334
    %v336 = vrcp.pop %v315
    %v337 = vmul.f32 1.0, %v336
    %v338 = vrcp.pop %v316
    %v339 = vmul.f32 1.0, %v338
    %v340 = vrcp.pop %v317
    %v341 = vmul.f32 1.0, %v340
    %v342 = vrcp.pop %v318
    %v343 = vmul.f32 1.0, %v342
    %v344 = vrcp.pop %v319
    %v345 = vmul.f32 1.0, %v344
    %v346 = vrcp.pop %v320
    %v347 = vmul.f32 1.0, %v346
    %v348 = vrcp.pop %v321
    %v349 = vmul.f32 1.0, %v348
    %v350 = vrcp.pop %v322
    %v351 = vmul.f32 1.0, %v350
    %v352 = vrcp.pop %v323
    %v353 = vmul.f32 1.0, %v352
    %v354 = vrcp.pop %v324
    %v355 = vmul.f32 1.0, %v354
    %v356 = vrcp.pop %v325
    %v357 = vmul.f32 1.0, %v356
    %v358 = vmul.f32 %v246, %v327
    %v359 = vmul.f32 %v247, %v329
    %v360 = vmul.f32 %v248, %v331
    %v361 = vmul.f32 %v249, %v333
    %v362 = vmul.f32 %v250, %v335
    %v363 = vmul.f32 %v251, %v337
    %v364 = vmul.f32 %v252, %v339
    %v365 = vmul.f32 %v253, %v341
    %v366 = vmul.f32 %v254, %v343
    %v367 = vmul.f32 %v255, %v345
    %v368 = vmul.f32 %v256, %v347
    %v369 = vmul.f32 %v257, %v349
    %v370 = vmul.f32 %v258, %v351
    %v371 = vmul.f32 %v259, %v353
    %v372 = vmul.f32 %v260, %v355
    %v373 = vmul.f32 %v261, %v357
    %v374 = vld [vmem:[%s3] sm:$0x1]
    %v376 = vlaneseq
    %v377 = vshrl.u32 %v376, 7
    %v378 = vsub.s32 0, %v377
    %v379 = vrot.slane %v374, %v378
    %v381 = vmul.f32 %v358, %v379
    %v382 = vmul.f32 %v359, %v379
    %v383 = vmul.f32 %v360, %v379
    %v384 = vmul.f32 %v361, %v379
    %v385 = vmul.f32 %v362, %v379
    %v386 = vmul.f32 %v363, %v379
    %v387 = vmul.f32 %v364, %v379
    %v388 = vmul.f32 %v365, %v379
    %v389 = vmul.f32 %v366, %v379
    %v390 = vmul.f32 %v367, %v379
    %v391 = vmul.f32 %v368, %v379
    %v392 = vmul.f32 %v369, %v379
    %v393 = vmul.f32 %v370, %v379
    %v394 = vmul.f32 %v371, %v379
    %v395 = vmul.f32 %v372, %v379
    %v396 = vmul.f32 %v373, %v379
    %vm397 = vcmask 130048
    %v398 = vsel %vm397, %v381, 0.0
    %399 = vadd.xlane.f32.xlu0 %v398
    %v400 = vpop.xlane.xlu0 %399
    %v401 = vsel %vm397, %v382, 0.0
    %402 = vadd.xlane.f32.xlu0 %v401
    %v403 = vpop.xlane.xlu0 %402
    %v404 = vsel %vm397, %v383, 0.0
    %405 = vadd.xlane.f32.xlu0 %v404
    %v406 = vpop.xlane.xlu0 %405
    %v407 = vsel %vm397, %v384, 0.0
    %408 = vadd.xlane.f32.xlu0 %v407
    %v409 = vpop.xlane.xlu0 %408
    %v410 = vsel %vm397, %v385, 0.0
    %411 = vadd.xlane.f32.xlu0 %v410
    %v412 = vpop.xlane.xlu0 %411
    %v413 = vsel %vm397, %v386, 0.0
    %414 = vadd.xlane.f32.xlu0 %v413
    %v415 = vpop.xlane.xlu0 %414
    %v416 = vsel %vm397, %v387, 0.0
    %417 = vadd.xlane.f32.xlu0 %v416
    %v418 = vpop.xlane.xlu0 %417
    %v419 = vsel %vm397, %v388, 0.0
    %420 = vadd.xlane.f32.xlu0 %v419
    %v421 = vpop.xlane.xlu0 %420
    %v422 = vsel %vm397, %v389, 0.0
    %423 = vadd.xlane.f32.xlu0 %v422
    %v424 = vpop.xlane.xlu0 %423
    %v425 = vsel %vm397, %v390, 0.0
    %426 = vadd.xlane.f32.xlu0 %v425
    %v427 = vpop.xlane.xlu0 %426
    %v428 = vsel %vm397, %v391, 0.0
    %429 = vadd.xlane.f32.xlu0 %v428
    %v430 = vpop.xlane.xlu0 %429
    %v431 = vsel %vm397, %v392, 0.0
    %432 = vadd.xlane.f32.xlu0 %v431
    %v433 = vpop.xlane.xlu0 %432
    %v434 = vsel %vm397, %v393, 0.0
    %435 = vadd.xlane.f32.xlu0 %v434
    %v436 = vpop.xlane.xlu0 %435
    %v437 = vsel %vm397, %v394, 0.0
    %438 = vadd.xlane.f32.xlu0 %v437
    %v439 = vpop.xlane.xlu0 %438
    %v440 = vsel %vm397, %v395, 0.0
    %441 = vadd.xlane.f32.xlu0 %v440
    %v442 = vpop.xlane.xlu0 %441
    %v443 = vsel %vm397, %v396, 0.0
    %444 = vadd.xlane.f32.xlu0 %v443
    %v445 = vpop.xlane.xlu0 %444
    %s446 = sld [smem:[#allocation2]]
    %v447 = vstv %s446
    %v448 = vadd.f32 %v400, %v447
    %v449 = vadd.f32 %v403, %v447
    %v450 = vadd.f32 %v406, %v447
    %v451 = vadd.f32 %v409, %v447
    %v452 = vadd.f32 %v412, %v447
    %v453 = vadd.f32 %v415, %v447
    %v454 = vadd.f32 %v418, %v447
    %v455 = vadd.f32 %v421, %v447
    %v456 = vadd.f32 %v424, %v447
    %v457 = vadd.f32 %v427, %v447
    %v458 = vadd.f32 %v430, %v447
    %v459 = vadd.f32 %v433, %v447
    %v460 = vadd.f32 %v436, %v447
    %v461 = vadd.f32 %v439, %v447
    %v462 = vadd.f32 %v442, %v447
    %v463 = vadd.f32 %v445, %v447
    %vm464 = vcmask 654464
    %v465 = vsel %vm464, %v161, -inf
    %466 = vmax.xlane.f32.xlu0 %v465
    %v467 = vpop.xlane.xlu0 %466
    %v468 = vsel %vm464, %v166, -inf
    %469 = vmax.xlane.f32.xlu0 %v468
    %v470 = vpop.xlane.xlu0 %469
    %v471 = vsel %vm464, %v171, -inf
    %472 = vmax.xlane.f32.xlu0 %v471
    %v473 = vpop.xlane.xlu0 %472
    %v474 = vsel %vm464, %v176, -inf
    %475 = vmax.xlane.f32.xlu0 %v474
    %v476 = vpop.xlane.xlu0 %475
    %v477 = vsel %vm464, %v181, -inf
    %478 = vmax.xlane.f32.xlu0 %v477
    %v479 = vpop.xlane.xlu0 %478
    %v480 = vsel %vm464, %v186, -inf
    %481 = vmax.xlane.f32.xlu0 %v480
    %v482 = vpop.xlane.xlu0 %481
    %v483 = vsel %vm464, %v191, -inf
    %484 = vmax.xlane.f32.xlu0 %v483
    %v485 = vpop.xlane.xlu0 %484
    %v486 = vsel %vm464, %v196, -inf
    %487 = vmax.xlane.f32.xlu0 %v486
    %v488 = vpop.xlane.xlu0 %487
    %v489 = vsel %vm464, %v201, -inf
    %490 = vmax.xlane.f32.xlu0 %v489
    %v491 = vpop.xlane.xlu0 %490
    %v492 = vsel %vm464, %v206, -inf
    %493 = vmax.xlane.f32.xlu0 %v492
    %v494 = vpop.xlane.xlu0 %493
    %v495 = vsel %vm464, %v211, -inf
    %496 = vmax.xlane.f32.xlu0 %v495
    %v497 = vpop.xlane.xlu0 %496
    %v498 = vsel %vm464, %v216, -inf
    %499 = vmax.xlane.f32.xlu0 %v498
    %v500 = vpop.xlane.xlu0 %499
    %v501 = vsel %vm464, %v221, -inf
    %502 = vmax.xlane.f32.xlu0 %v501
    %v503 = vpop.xlane.xlu0 %502
    %v504 = vsel %vm464, %v226, -inf
    %505 = vmax.xlane.f32.xlu0 %v504
    %v506 = vpop.xlane.xlu0 %505
    %v507 = vsel %vm464, %v231, -inf
    %508 = vmax.xlane.f32.xlu0 %v507
    %v509 = vpop.xlane.xlu0 %508
    %v510 = vsel %vm464, %v236, -inf
    %511 = vmax.xlane.f32.xlu0 %v510
    %v512 = vpop.xlane.xlu0 %511
    %v513 = vsub.f32 %v161, %v467
    %v514 = vsub.f32 %v166, %v470
    %v515 = vsub.f32 %v171, %v473
    %v516 = vsub.f32 %v176, %v476
    %v517 = vsub.f32 %v181, %v479
    %v518 = vsub.f32 %v186, %v482
    %v519 = vsub.f32 %v191, %v485
    %v520 = vsub.f32 %v196, %v488
    %v521 = vsub.f32 %v201, %v491
    %v522 = vsub.f32 %v206, %v494
    %v523 = vsub.f32 %v211, %v497
    %v524 = vsub.f32 %v216, %v500
    %v525 = vsub.f32 %v221, %v503
    %v526 = vsub.f32 %v226, %v506
    %v527 = vsub.f32 %v231, %v509
    %v528 = vsub.f32 %v236, %v512
    %v529 = vmul.f32 %v513, 1.442695
    %v530 = vpow.pop %v529
    %v531 = vmul.f32 %v514, 1.442695
    %v532 = vpow.pop %v531
    %v533 = vmul.f32 %v515, 1.442695
    %v534 = vpow.pop %v533
    %v535 = vmul.f32 %v516, 1.442695
    %v536 = vpow.pop %v535
    %v537 = vmul.f32 %v517, 1.442695
    %v538 = vpow.pop %v537
    %v539 = vmul.f32 %v518, 1.442695
    %v540 = vpow.pop %v539
    %v541 = vmul.f32 %v519, 1.442695
    %v542 = vpow.pop %v541
    %v543 = vmul.f32 %v520, 1.442695
    %v544 = vpow.pop %v543
    %v545 = vmul.f32 %v521, 1.442695
    %v546 = vpow.pop %v545
    %v547 = vmul.f32 %v522, 1.442695
    %v548 = vpow.pop %v547
    %v549 = vmul.f32 %v523, 1.442695
    %v550 = vpow.pop %v549
    %v551 = vmul.f32 %v524, 1.442695
    %v552 = vpow.pop %v551
    %v553 = vmul.f32 %v525, 1.442695
    %v554 = vpow.pop %v553
    %v555 = vmul.f32 %v526, 1.442695
    %v556 = vpow.pop %v555
    %v557 = vmul.f32 %v527, 1.442695
    %v558 = vpow.pop %v557
    %v559 = vmul.f32 %v528, 1.442695
    %v560 = vpow.pop %v559
    %v561 = vld [vmem:[%s4] sm:$0x1]
    %v563 = vlaneseq
    %v564 = vshrl.u32 %v563, 7
    %v565 = vsub.s32 0, %v564
    %v566 = vrot.slane %v561, %v565
    %567 = vrot.lane.b32.xlu0 %v566, 16
    %v568 = vpop.permute.xlu0 %567
    %v570 = vmul.f32 %v530, %v568
    %v571 = vmul.f32 %v532, %v568
    %v572 = vmul.f32 %v534, %v568
    %v573 = vmul.f32 %v536, %v568
    %v574 = vmul.f32 %v538, %v568
    %v575 = vmul.f32 %v540, %v568
    %v576 = vmul.f32 %v542, %v568
    %v577 = vmul.f32 %v544, %v568
    %v578 = vmul.f32 %v546, %v568
    %v579 = vmul.f32 %v548, %v568
    %v580 = vmul.f32 %v550, %v568
    %v581 = vmul.f32 %v552, %v568
    %v582 = vmul.f32 %v554, %v568
    %v583 = vmul.f32 %v556, %v568
    %v584 = vmul.f32 %v558, %v568
    %v585 = vmul.f32 %v560, %v568
    %602 = vrot.lane.b32.xlu0 %v570, 112
    %v603 = vpop.permute.xlu0 %602
    %604 = vrot.lane.b32.xlu0 %v571, 112
    %v605 = vpop.permute.xlu0 %604
    %606 = vrot.lane.b32.xlu0 %v572, 112
    %v607 = vpop.permute.xlu0 %606
    %608 = vrot.lane.b32.xlu0 %v573, 112
    %v609 = vpop.permute.xlu0 %608
    %610 = vrot.lane.b32.xlu0 %v574, 112
    %v611 = vpop.permute.xlu0 %610
    %612 = vrot.lane.b32.xlu0 %v575, 112
    %v613 = vpop.permute.xlu0 %612
    %614 = vrot.lane.b32.xlu0 %v576, 112
    %v615 = vpop.permute.xlu0 %614
    %616 = vrot.lane.b32.xlu0 %v577, 112
    %v617 = vpop.permute.xlu0 %616
    %618 = vrot.lane.b32.xlu0 %v578, 112
    %v619 = vpop.permute.xlu0 %618
    %620 = vrot.lane.b32.xlu0 %v579, 112
    %v621 = vpop.permute.xlu0 %620
    %622 = vrot.lane.b32.xlu0 %v580, 112
    %v623 = vpop.permute.xlu0 %622
    %624 = vrot.lane.b32.xlu0 %v581, 112
    %v625 = vpop.permute.xlu0 %624
    %626 = vrot.lane.b32.xlu0 %v582, 112
    %v627 = vpop.permute.xlu0 %626
    %628 = vrot.lane.b32.xlu0 %v583, 112
    %v629 = vpop.permute.xlu0 %628
    %630 = vrot.lane.b32.xlu0 %v584, 112
    %v631 = vpop.permute.xlu0 %630
    %632 = vrot.lane.b32.xlu0 %v585, 112
    %v633 = vpop.permute.xlu0 %632
    %vm650 = vcmask 523264
    %v651 = vsel %vm650, %v603, 0.0
    %652 = vadd.xlane.f32.xlu0 %v651
    %v653 = vpop.xlane.xlu0 %652
    %v654 = vsel %vm650, %v605, 0.0
    %655 = vadd.xlane.f32.xlu0 %v654
    %v656 = vpop.xlane.xlu0 %655
    %v657 = vsel %vm650, %v607, 0.0
    %658 = vadd.xlane.f32.xlu0 %v657
    %v659 = vpop.xlane.xlu0 %658
    %v660 = vsel %vm650, %v609, 0.0
    %661 = vadd.xlane.f32.xlu0 %v660
    %v662 = vpop.xlane.xlu0 %661
    %v663 = vsel %vm650, %v611, 0.0
    %664 = vadd.xlane.f32.xlu0 %v663
    %v665 = vpop.xlane.xlu0 %664
    %v666 = vsel %vm650, %v613, 0.0
    %667 = vadd.xlane.f32.xlu0 %v666
    %v668 = vpop.xlane.xlu0 %667
    %v669 = vsel %vm650, %v615, 0.0
    %670 = vadd.xlane.f32.xlu0 %v669
    %v671 = vpop.xlane.xlu0 %670
    %v672 = vsel %vm650, %v617, 0.0
    %673 = vadd.xlane.f32.xlu0 %v672
    %v674 = vpop.xlane.xlu0 %673
    %v675 = vsel %vm650, %v619, 0.0
    %676 = vadd.xlane.f32.xlu0 %v675
    %v677 = vpop.xlane.xlu0 %676
    %v678 = vsel %vm650, %v621, 0.0
    %679 = vadd.xlane.f32.xlu0 %v678
    %v680 = vpop.xlane.xlu0 %679
    %v681 = vsel %vm650, %v623, 0.0
    %682 = vadd.xlane.f32.xlu0 %v681
    %v683 = vpop.xlane.xlu0 %682
    %v684 = vsel %vm650, %v625, 0.0
    %685 = vadd.xlane.f32.xlu0 %v684
    %v686 = vpop.xlane.xlu0 %685
    %v687 = vsel %vm650, %v627, 0.0
    %688 = vadd.xlane.f32.xlu0 %v687
    %v689 = vpop.xlane.xlu0 %688
    %v690 = vsel %vm650, %v629, 0.0
    %691 = vadd.xlane.f32.xlu0 %v690
    %v692 = vpop.xlane.xlu0 %691
    %v693 = vsel %vm650, %v631, 0.0
    %694 = vadd.xlane.f32.xlu0 %v693
    %v695 = vpop.xlane.xlu0 %694
    %v696 = vsel %vm650, %v633, 0.0
    %697 = vadd.xlane.f32.xlu0 %v696
    %v698 = vpop.xlane.xlu0 %697
    %715 = vrot.lane.b32.xlu0 %v530, 112
    %v716 = vpop.permute.xlu0 %715
    %717 = vrot.lane.b32.xlu0 %v532, 112
    %v718 = vpop.permute.xlu0 %717
    %719 = vrot.lane.b32.xlu0 %v534, 112
    %v720 = vpop.permute.xlu0 %719
    %721 = vrot.lane.b32.xlu0 %v536, 112
    %v722 = vpop.permute.xlu0 %721
    %723 = vrot.lane.b32.xlu0 %v538, 112
    %v724 = vpop.permute.xlu0 %723
    %725 = vrot.lane.b32.xlu0 %v540, 112
    %v726 = vpop.permute.xlu0 %725
    %727 = vrot.lane.b32.xlu0 %v542, 112
    %v728 = vpop.permute.xlu0 %727
    %729 = vrot.lane.b32.xlu0 %v544, 112
    %v730 = vpop.permute.xlu0 %729
    %731 = vrot.lane.b32.xlu0 %v546, 112
    %v732 = vpop.permute.xlu0 %731
    %733 = vrot.lane.b32.xlu0 %v548, 112
    %v734 = vpop.permute.xlu0 %733
    %735 = vrot.lane.b32.xlu0 %v550, 112
    %v736 = vpop.permute.xlu0 %735
    %737 = vrot.lane.b32.xlu0 %v552, 112
    %v738 = vpop.permute.xlu0 %737
    %739 = vrot.lane.b32.xlu0 %v554, 112
    %v740 = vpop.permute.xlu0 %739
    %741 = vrot.lane.b32.xlu0 %v556, 112
    %v742 = vpop.permute.xlu0 %741
    %743 = vrot.lane.b32.xlu0 %v558, 112
    %v744 = vpop.permute.xlu0 %743
    %745 = vrot.lane.b32.xlu0 %v560, 112
    %v746 = vpop.permute.xlu0 %745
    %v763 = vsel %vm650, %v716, 0.0
    %764 = vadd.xlane.f32.xlu0 %v763
    %v765 = vpop.xlane.xlu0 %764
    %v766 = vsel %vm650, %v718, 0.0
    %767 = vadd.xlane.f32.xlu0 %v766
    %v768 = vpop.xlane.xlu0 %767
    %v769 = vsel %vm650, %v720, 0.0
    %770 = vadd.xlane.f32.xlu0 %v769
    %v771 = vpop.xlane.xlu0 %770
    %v772 = vsel %vm650, %v722, 0.0
    %773 = vadd.xlane.f32.xlu0 %v772
    %v774 = vpop.xlane.xlu0 %773
    %v775 = vsel %vm650, %v724, 0.0
    %776 = vadd.xlane.f32.xlu0 %v775
    %v777 = vpop.xlane.xlu0 %776
    %v778 = vsel %vm650, %v726, 0.0
    %779 = vadd.xlane.f32.xlu0 %v778
    %v780 = vpop.xlane.xlu0 %779
    %v781 = vsel %vm650, %v728, 0.0
    %782 = vadd.xlane.f32.xlu0 %v781
    %v783 = vpop.xlane.xlu0 %782
    %v784 = vsel %vm650, %v730, 0.0
    %785 = vadd.xlane.f32.xlu0 %v784
    %v786 = vpop.xlane.xlu0 %785
    %v787 = vsel %vm650, %v732, 0.0
    %788 = vadd.xlane.f32.xlu0 %v787
    %v789 = vpop.xlane.xlu0 %788
    %v790 = vsel %vm650, %v734, 0.0
    %791 = vadd.xlane.f32.xlu0 %v790
    %v792 = vpop.xlane.xlu0 %791
    %v793 = vsel %vm650, %v736, 0.0
    %794 = vadd.xlane.f32.xlu0 %v793
    %v795 = vpop.xlane.xlu0 %794
    %v796 = vsel %vm650, %v738, 0.0
    %797 = vadd.xlane.f32.xlu0 %v796
    %v798 = vpop.xlane.xlu0 %797
    %v799 = vsel %vm650, %v740, 0.0
    %800 = vadd.xlane.f32.xlu0 %v799
    %v801 = vpop.xlane.xlu0 %800
    %v802 = vsel %vm650, %v742, 0.0
    %803 = vadd.xlane.f32.xlu0 %v802
    %v804 = vpop.xlane.xlu0 %803
    %v805 = vsel %vm650, %v744, 0.0
    %806 = vadd.xlane.f32.xlu0 %v805
    %v807 = vpop.xlane.xlu0 %806
    %v808 = vsel %vm650, %v746, 0.0
    %809 = vadd.xlane.f32.xlu0 %v808
    %v810 = vpop.xlane.xlu0 %809
    %v811 = vrcp.pop %v765
    %v812 = vrcp.pop %v768
    %v813 = vrcp.pop %v771
    %v814 = vrcp.pop %v774
    %v815 = vrcp.pop %v777
    %v816 = vrcp.pop %v780
    %v817 = vrcp.pop %v783
    %v818 = vrcp.pop %v786
    %v819 = vrcp.pop %v789
    %v820 = vrcp.pop %v792
    %v821 = vrcp.pop %v795
    %v822 = vrcp.pop %v798
    %v823 = vrcp.pop %v801
    %v824 = vrcp.pop %v804
    %v825 = vrcp.pop %v807
    %v826 = vrcp.pop %v810
    %v827 = vmul.f32 %v653, %v811
    %v828 = vmul.f32 %v656, %v812
    %v829 = vmul.f32 %v659, %v813
    %v830 = vmul.f32 %v662, %v814
    %v831 = vmul.f32 %v665, %v815
    %v832 = vmul.f32 %v668, %v816
    %v833 = vmul.f32 %v671, %v817
    %v834 = vmul.f32 %v674, %v818
    %v835 = vmul.f32 %v677, %v819
    %v836 = vmul.f32 %v680, %v820
    %v837 = vmul.f32 %v683, %v821
    %v838 = vmul.f32 %v686, %v822
    %v839 = vmul.f32 %v689, %v823
    %v840 = vmul.f32 %v692, %v824
    %v841 = vmul.f32 %v695, %v825
    %v842 = vmul.f32 %v698, %v826
    %v843 = vxor.u32 %v448, 2147483648
    %v844 = vxor.u32 %v449, 2147483648
    %v845 = vxor.u32 %v450, 2147483648
    %v846 = vxor.u32 %v451, 2147483648
    %v847 = vxor.u32 %v452, 2147483648
    %v848 = vxor.u32 %v453, 2147483648
    %v849 = vxor.u32 %v454, 2147483648
    %v850 = vxor.u32 %v455, 2147483648
    %v851 = vxor.u32 %v456, 2147483648
    %v852 = vxor.u32 %v457, 2147483648
    %v853 = vxor.u32 %v458, 2147483648
    %v854 = vxor.u32 %v459, 2147483648
    %v855 = vxor.u32 %v460, 2147483648
    %v856 = vxor.u32 %v461, 2147483648
    %v857 = vxor.u32 %v462, 2147483648
    %v858 = vxor.u32 %v463, 2147483648
    %v859 = vmul.f32 %v843, 1.442695
    %v860 = vpow.pop %v859
    %v861 = vmul.f32 %v844, 1.442695
    %v862 = vpow.pop %v861
    %v863 = vmul.f32 %v845, 1.442695
    %v864 = vpow.pop %v863
    %v865 = vmul.f32 %v846, 1.442695
    %v866 = vpow.pop %v865
    %v867 = vmul.f32 %v847, 1.442695
    %v868 = vpow.pop %v867
    %v869 = vmul.f32 %v848, 1.442695
    %v870 = vpow.pop %v869
    %v871 = vmul.f32 %v849, 1.442695
    %v872 = vpow.pop %v871
    %v873 = vmul.f32 %v850, 1.442695
    %v874 = vpow.pop %v873
    %v875 = vmul.f32 %v851, 1.442695
    %v876 = vpow.pop %v875
    %v877 = vmul.f32 %v852, 1.442695
    %v878 = vpow.pop %v877
    %v879 = vmul.f32 %v853, 1.442695
    %v880 = vpow.pop %v879
    %v881 = vmul.f32 %v854, 1.442695
    %v882 = vpow.pop %v881
    %v883 = vmul.f32 %v855, 1.442695
    %v884 = vpow.pop %v883
    %v885 = vmul.f32 %v856, 1.442695
    %v886 = vpow.pop %v885
    %v887 = vmul.f32 %v857, 1.442695
    %v888 = vpow.pop %v887
    %v889 = vmul.f32 %v858, 1.442695
    %v890 = vpow.pop %v889
    %v891 = vadd.f32 %v860, 1.0
    %v892 = vadd.f32 %v862, 1.0
    %v893 = vadd.f32 %v864, 1.0
    %v894 = vadd.f32 %v866, 1.0
    %v895 = vadd.f32 %v868, 1.0
    %v896 = vadd.f32 %v870, 1.0
    %v897 = vadd.f32 %v872, 1.0
    %v898 = vadd.f32 %v874, 1.0
    %v899 = vadd.f32 %v876, 1.0
    %v900 = vadd.f32 %v878, 1.0
    %v901 = vadd.f32 %v880, 1.0
    %v902 = vadd.f32 %v882, 1.0
    %v903 = vadd.f32 %v884, 1.0
    %v904 = vadd.f32 %v886, 1.0
    %v905 = vadd.f32 %v888, 1.0
    %v906 = vadd.f32 %v890, 1.0
    %v907 = vrcp.pop %v891
    %v908 = vmul.f32 1.0, %v907
    %v909 = vrcp.pop %v892
    %v910 = vmul.f32 1.0, %v909
    %v911 = vrcp.pop %v893
    %v912 = vmul.f32 1.0, %v911
    %v913 = vrcp.pop %v894
    %v914 = vmul.f32 1.0, %v913
    %v915 = vrcp.pop %v895
    %v916 = vmul.f32 1.0, %v915
    %v917 = vrcp.pop %v896
    %v918 = vmul.f32 1.0, %v917
    %v919 = vrcp.pop %v897
    %v920 = vmul.f32 1.0, %v919
    %v921 = vrcp.pop %v898
    %v922 = vmul.f32 1.0, %v921
    %v923 = vrcp.pop %v899
    %v924 = vmul.f32 1.0, %v923
    %v925 = vrcp.pop %v900
    %v926 = vmul.f32 1.0, %v925
    %v927 = vrcp.pop %v901
    %v928 = vmul.f32 1.0, %v927
    %v929 = vrcp.pop %v902
    %v930 = vmul.f32 1.0, %v929
    %v931 = vrcp.pop %v903
    %v932 = vmul.f32 1.0, %v931
    %v933 = vrcp.pop %v904
    %v934 = vmul.f32 1.0, %v933
    %v935 = vrcp.pop %v905
    %v936 = vmul.f32 1.0, %v935
    %v937 = vrcp.pop %v906
    %v938 = vmul.f32 1.0, %v937
    %v939 = vxor.u32 %v827, 2147483648
    %v940 = vxor.u32 %v828, 2147483648
    %v941 = vxor.u32 %v829, 2147483648
    %v942 = vxor.u32 %v830, 2147483648
    %v943 = vxor.u32 %v831, 2147483648
    %v944 = vxor.u32 %v832, 2147483648
    %v945 = vxor.u32 %v833, 2147483648
    %v946 = vxor.u32 %v834, 2147483648
    %v947 = vxor.u32 %v835, 2147483648
    %v948 = vxor.u32 %v836, 2147483648
    %v949 = vxor.u32 %v837, 2147483648
    %v950 = vxor.u32 %v838, 2147483648
    %v951 = vxor.u32 %v839, 2147483648
    %v952 = vxor.u32 %v840, 2147483648
    %v953 = vxor.u32 %v841, 2147483648
    %v954 = vxor.u32 %v842, 2147483648
    %v955 = vmul.f32 %v939, 1.442695
    %v956 = vpow.pop %v955
    %v957 = vmul.f32 %v940, 1.442695
    %v958 = vpow.pop %v957
    %v959 = vmul.f32 %v941, 1.442695
    %v960 = vpow.pop %v959
    %v961 = vmul.f32 %v942, 1.442695
    %v962 = vpow.pop %v961
    %v963 = vmul.f32 %v943, 1.442695
    %v964 = vpow.pop %v963
    %v965 = vmul.f32 %v944, 1.442695
    %v966 = vpow.pop %v965
    %v967 = vmul.f32 %v945, 1.442695
    %v968 = vpow.pop %v967
    %v969 = vmul.f32 %v946, 1.442695
    %v970 = vpow.pop %v969
    %v971 = vmul.f32 %v947, 1.442695
    %v972 = vpow.pop %v971
    %v973 = vmul.f32 %v948, 1.442695
    %v974 = vpow.pop %v973
    %v975 = vmul.f32 %v949, 1.442695
    %v976 = vpow.pop %v975
    %v977 = vmul.f32 %v950, 1.442695
    %v978 = vpow.pop %v977
    %v979 = vmul.f32 %v951, 1.442695
    %v980 = vpow.pop %v979
    %v981 = vmul.f32 %v952, 1.442695
    %v982 = vpow.pop %v981
    %v983 = vmul.f32 %v953, 1.442695
    %v984 = vpow.pop %v983
    %v985 = vmul.f32 %v954, 1.442695
    %v986 = vpow.pop %v985
    %v987 = vadd.f32 %v956, 1.0
    %v988 = vadd.f32 %v958, 1.0
    %v989 = vadd.f32 %v960, 1.0
    %v990 = vadd.f32 %v962, 1.0
    %v991 = vadd.f32 %v964, 1.0
    %v992 = vadd.f32 %v966, 1.0
    %v993 = vadd.f32 %v968, 1.0
    %v994 = vadd.f32 %v970, 1.0
    %v995 = vadd.f32 %v972, 1.0
    %v996 = vadd.f32 %v974, 1.0
    %v997 = vadd.f32 %v976, 1.0
    %v998 = vadd.f32 %v978, 1.0
    %v999 = vadd.f32 %v980, 1.0
    %v1000 = vadd.f32 %v982, 1.0
    %v1001 = vadd.f32 %v984, 1.0
    %v1002 = vadd.f32 %v986, 1.0
    %v1003 = vrcp.pop %v987
    %v1004 = vmul.f32 1.0, %v1003
    %v1005 = vrcp.pop %v988
    %v1006 = vmul.f32 1.0, %v1005
    %v1007 = vrcp.pop %v989
    %v1008 = vmul.f32 1.0, %v1007
    %v1009 = vrcp.pop %v990
    %v1010 = vmul.f32 1.0, %v1009
    %v1011 = vrcp.pop %v991
    %v1012 = vmul.f32 1.0, %v1011
    %v1013 = vrcp.pop %v992
    %v1014 = vmul.f32 1.0, %v1013
    %v1015 = vrcp.pop %v993
    %v1016 = vmul.f32 1.0, %v1015
    %v1017 = vrcp.pop %v994
    %v1018 = vmul.f32 1.0, %v1017
    %v1019 = vrcp.pop %v995
    %v1020 = vmul.f32 1.0, %v1019
    %v1021 = vrcp.pop %v996
    %v1022 = vmul.f32 1.0, %v1021
    %v1023 = vrcp.pop %v997
    %v1024 = vmul.f32 1.0, %v1023
    %v1025 = vrcp.pop %v998
    %v1026 = vmul.f32 1.0, %v1025
    %v1027 = vrcp.pop %v999
    %v1028 = vmul.f32 1.0, %v1027
    %v1029 = vrcp.pop %v1000
    %v1030 = vmul.f32 1.0, %v1029
    %v1031 = vrcp.pop %v1001
    %v1032 = vmul.f32 1.0, %v1031
    %v1033 = vrcp.pop %v1002
    %v1034 = vmul.f32 1.0, %v1033
    %v1035 = vadd.f32 %v908, %v1004
    %v1036 = vadd.f32 %v910, %v1006
    %v1037 = vadd.f32 %v912, %v1008
    %v1038 = vadd.f32 %v914, %v1010
    %v1039 = vadd.f32 %v916, %v1012
    %v1040 = vadd.f32 %v918, %v1014
    %v1041 = vadd.f32 %v920, %v1016
    %v1042 = vadd.f32 %v922, %v1018
    %v1043 = vadd.f32 %v924, %v1020
    %v1044 = vadd.f32 %v926, %v1022
    %v1045 = vadd.f32 %v928, %v1024
    %v1046 = vadd.f32 %v930, %v1026
    %v1047 = vadd.f32 %v932, %v1028
    %v1048 = vadd.f32 %v934, %v1030
    %v1049 = vadd.f32 %v936, %v1032
    %v1050 = vadd.f32 %v938, %v1034
    %v1051 = vmul.f32 %v1035, 0.5
    %v1052 = vmul.f32 %v1036, 0.5
    %v1053 = vmul.f32 %v1037, 0.5
    %v1054 = vmul.f32 %v1038, 0.5
    %v1055 = vmul.f32 %v1039, 0.5
    %v1056 = vmul.f32 %v1040, 0.5
    %v1057 = vmul.f32 %v1041, 0.5
    %v1058 = vmul.f32 %v1042, 0.5
    %v1059 = vmul.f32 %v1043, 0.5
    %v1060 = vmul.f32 %v1044, 0.5
    %v1061 = vmul.f32 %v1045, 0.5
    %v1062 = vmul.f32 %v1046, 0.5
    %v1063 = vmul.f32 %v1047, 0.5
    %v1064 = vmul.f32 %v1048, 0.5
    %v1065 = vmul.f32 %v1049, 0.5
    %v1066 = vmul.f32 %v1050, 0.5
    %v1083 = vlaneseq
    %v1084 = vand.u32 %v1083, 127
    %v1085 = vlaneseq
    %v1086 = vshrl.u32 %v1085, 7
    %v1087 = vsub.s32 %v1084, %v1086
    %v1088 = vrot.slane %v1051, %v1087
    %v1089 = vadd.s32 %v1084, 4294967288
    %v1090 = vlaneseq
    %v1091 = vshrl.u32 %v1090, 7
    %v1092 = vsub.s32 %v1089, %v1091
    %v1093 = vrot.slane %v1052, %v1092
    %vm1094 = vcmask 130112
    %v1095 = vsel %vm1094, %v1093, %v1088
    %v1096 = vadd.s32 %v1084, 4294967280
    %v1097 = vlaneseq
    %v1098 = vshrl.u32 %v1097, 7
    %v1099 = vsub.s32 %v1096, %v1098
    %v1100 = vrot.slane %v1053, %v1099
    %vm1101 = vcmask 195712
    %v1102 = vsel %vm1101, %v1100, %v1095
    %v1103 = vadd.s32 %v1084, 4294967272
    %v1104 = vlaneseq
    %v1105 = vshrl.u32 %v1104, 7
    %v1106 = vsub.s32 %v1103, %v1105
    %v1107 = vrot.slane %v1054, %v1106
    %vm1108 = vcmask 261312
    %v1109 = vsel %vm1108, %v1107, %v1102
    %v1110 = vadd.s32 %v1084, 4294967264
    %v1111 = vlaneseq
    %v1112 = vshrl.u32 %v1111, 7
    %v1113 = vsub.s32 %v1110, %v1112
    %v1114 = vrot.slane %v1055, %v1113
    %vm1115 = vcmask 326912
    %v1116 = vsel %vm1115, %v1114, %v1109
    %v1117 = vadd.s32 %v1084, 4294967256
    %v1118 = vlaneseq
    %v1119 = vshrl.u32 %v1118, 7
    %v1120 = vsub.s32 %v1117, %v1119
    %v1121 = vrot.slane %v1056, %v1120
    %vm1122 = vcmask 392512
    %v1123 = vsel %vm1122, %v1121, %v1116
    %v1124 = vadd.s32 %v1084, 4294967248
    %v1125 = vlaneseq
    %v1126 = vshrl.u32 %v1125, 7
    %v1127 = vsub.s32 %v1124, %v1126
    %v1128 = vrot.slane %v1057, %v1127
    %vm1129 = vcmask 458112
    %v1130 = vsel %vm1129, %v1128, %v1123
    %v1131 = vadd.s32 %v1084, 4294967240
    %v1132 = vlaneseq
    %v1133 = vshrl.u32 %v1132, 7
    %v1134 = vsub.s32 %v1131, %v1133
    %v1135 = vrot.slane %v1058, %v1134
    %vm1136 = vcmask 523712
    %v1137 = vsel %vm1136, %v1135, %v1130
    %v1138 = vadd.s32 %v1084, 4294967232
    %v1139 = vlaneseq
    %v1140 = vshrl.u32 %v1139, 7
    %v1141 = vsub.s32 %v1138, %v1140
    %v1142 = vrot.slane %v1059, %v1141
    %vm1143 = vcmask 589312
    %v1144 = vsel %vm1143, %v1142, %v1137
    %v1145 = vadd.s32 %v1084, 4294967224
    %v1146 = vlaneseq
    %v1147 = vshrl.u32 %v1146, 7
    %v1148 = vsub.s32 %v1145, %v1147
    %v1149 = vrot.slane %v1060, %v1148
    %vm1150 = vcmask 654912
    %v1151 = vsel %vm1150, %v1149, %v1144
    %v1152 = vadd.s32 %v1084, 4294967216
    %v1153 = vlaneseq
    %v1154 = vshrl.u32 %v1153, 7
    %v1155 = vsub.s32 %v1152, %v1154
    %v1156 = vrot.slane %v1061, %v1155
    %vm1157 = vcmask 720512
    %v1158 = vsel %vm1157, %v1156, %v1151
    %v1159 = vadd.s32 %v1084, 4294967208
    %v1160 = vlaneseq
    %v1161 = vshrl.u32 %v1160, 7
    %v1162 = vsub.s32 %v1159, %v1161
    %v1163 = vrot.slane %v1062, %v1162
    %vm1164 = vcmask 786112
    %v1165 = vsel %vm1164, %v1163, %v1158
    %v1166 = vadd.s32 %v1084, 4294967200
    %v1167 = vlaneseq
    %v1168 = vshrl.u32 %v1167, 7
    %v1169 = vsub.s32 %v1166, %v1168
    %v1170 = vrot.slane %v1063, %v1169
    %vm1171 = vcmask 851712
    %v1172 = vsel %vm1171, %v1170, %v1165
    %v1173 = vadd.s32 %v1084, 4294967192
    %v1174 = vlaneseq
    %v1175 = vshrl.u32 %v1174, 7
    %v1176 = vsub.s32 %v1173, %v1175
    %v1177 = vrot.slane %v1064, %v1176
    %vm1178 = vcmask 917312
    %v1179 = vsel %vm1178, %v1177, %v1172
    %v1180 = vadd.s32 %v1084, 4294967184
    %v1181 = vlaneseq
    %v1182 = vshrl.u32 %v1181, 7
    %v1183 = vsub.s32 %v1180, %v1182
    %v1184 = vrot.slane %v1065, %v1183
    %vm1185 = vcmask 982912
    %v1186 = vsel %vm1185, %v1184, %v1179
    %v1187 = vadd.s32 %v1084, 4294967176
    %v1188 = vlaneseq
    %v1189 = vshrl.u32 %v1188, 7
    %v1190 = vsub.s32 %v1187, %v1189
    %v1191 = vrot.slane %v1066, %v1190
    %vm1192 = vcmask 1048512
    %v1193 = vsel %vm1192, %v1191, %v1186
    %1195 = vst [vmem:[#allocation3] sm:$0x1] %v1193
    // Predicated region
    $region26: #{tpu_custom_call.1} parent=1 // pred_check
      _
    $region27: #{tpu_custom_call.1} parent=1 // pred_check_branch
      %1197 = sbr.rel (0) target = $region29
    $region28: #{tpu_custom_call.1} parent=1 // pred_region
      %s1199 = ssub.s32 16, 16
      %1200 = vsyncadd [#allocation4], %s1199
      %s1202 = sshll.u32 [#allocation3], 4
      %s1203 = int_to_ptr.vmem [resolvable:$true] %s1202
      %1205 = dma.vmem_to_hbm [thread:$0]  %s1203, 16, %s6, [#allocation4]
    $region29: #{tpu_custom_call.1} parent=1 // pred_fallthru
      _
    // Predicated region
    $region30: #{tpu_custom_call.1} parent=1 // pred_check
      _
    $region31: #{tpu_custom_call.1} parent=1 // pred_check_branch
      %1207 = sbr.rel (0) target = $region33
    $region32: #{tpu_custom_call.1} parent=1 // pred_region
      %1208 = dma.done [#allocation4], 16
    $region33: #{tpu_custom_call.1} parent=1 // pred_fallthru
      _
    %1209 = vsyncpa [#allocation4], 1

</llo_original>
